<compile_context>
chip_gen: v7x
topology: tpu7x:2x2x1
jax: 0.10.0
libtpu: 0.0.40
codegen_flags: <defaults>
</compile_context>

<pallas_src>
import jax
import jax.numpy as jnp
from jax.experimental import pallas as pl
from jax.experimental.pallas import tpu as pltpu


# ----------------------------------------------------------------------------
# Kernels
# ----------------------------------------------------------------------------

def _pw_matmul_kernel(w_ref, x_ref, o_ref):
    # Single K pass: w (Cout, Cin) resident, x (Cin, tn), o (Cout, tn).
    o_ref[...] = jnp.dot(
        w_ref[...], x_ref[...],
        preferred_element_type=jnp.float32,
        precision=jax.lax.Precision.HIGHEST,
    ).astype(o_ref.dtype)


def _pw_matmul_ktiled_kernel(w_ref, x_ref, o_ref, acc_ref):
    # K-tiled path for large channel counts: accumulate over the Cin grid axis
    # in an f32 VMEM scratch, write the output tile on the last K step.
    @pl.when(pl.program_id(2) == 0)
    def _():
        acc_ref[...] = jnp.zeros_like(acc_ref)

    acc_ref[...] += jnp.dot(
        w_ref[...], x_ref[...],
        preferred_element_type=jnp.float32,
        precision=jax.lax.Precision.HIGHEST,
    )

    @pl.when(pl.program_id(2) == pl.num_programs(2) - 1)
    def _():
        o_ref[...] = acc_ref[...].astype(o_ref.dtype)


# ----------------------------------------------------------------------------
# Tiling / VMEM planning
# ----------------------------------------------------------------------------

def _cdiv(a, b):
    return (a + b - 1) // b


def _round_up(x, m):
    return ((x + m - 1) // m) * m


def _tpu_vmem_capacity_bytes():
    try:
        return int(pltpu.get_tpu_info().vmem_capacity_bytes)
    except Exception:
        return 64 << 20  # conservative fallback = v7x per-TensorCore VMEM


def _vmem_plan():
    """Generation-aware (tile_budget_bytes, vmem_limit_cap_bytes, multi_core).

    tile_budget_bytes bounds the double-buffered in+out working set picked by
    the tile-size heuristics below; vmem_limit_cap bounds the explicit
    vmem_limit_bytes handed to Mosaic.  Both come from one plan so raising the
    tile budget can never silently exceed the scoped-VMEM limit.
    """
    cap = _tpu_vmem_capacity_bytes()
    if cap >= (100 << 20):
        # v5e / v6e: 128 MiB physical VMEM, single TensorCore per chip.
        return 40 << 20, 64 << 20, False
    # v7x (or unknown): 64 MiB per TensorCore, 2 TCs share the chip.
    return 24 << 20, 44 << 20, True


def _balance_tn(tn, N, B, multi_core):
    # Megacore load-balance guard (v7x only): keep at least ~4 grid steps so
    # both TensorCores stay busy when B is small and tiles would otherwise
    # collapse the spatial axis to 1-2 tiles.  v5e/v6e are single-TC.
    if multi_core:
        while tn > 128 and B * _cdiv(N, tn) < 4:
            tn = max(128, (tn // 2) // 128 * 128)
    return tn


def _pick_tn_single(N, Cin, Cout, itemsize, budget_bytes, multi_core, B):
    # Bytes per spatial column: double-buffered input + output columns.
    per_col = itemsize * 2 * (Cin + Cout)
    tn = max(128, (budget_bytes // per_col) // 128 * 128)
    tn = min(tn, _round_up(N, 128))
    return _balance_tn(tn, N, B, multi_core)


# ----------------------------------------------------------------------------
# pallas_call wrappers
# ----------------------------------------------------------------------------

def _pw_matmul_single(w, x, out_dtype, budget_bytes, vmem_cap, multi_core):
    """w: (Cout, Cin), x: (B, Cin, N) -> (B, Cout, N); full-Cin per step."""
    B, Cin, N = x.shape
    Cout = w.shape[0]
    itemsize = jnp.dtype(x.dtype).itemsize
    w_itemsize = jnp.dtype(w.dtype).itemsize

    tn = _pick_tn_single(N, Cin, Cout, itemsize, budget_bytes, multi_core, B)
    grid = (B, _cdiv(N, tn))  # partial last tile: padded in, dropped out

    tile_bytes = itemsize * 2 * tn * (Cin + Cout) + w_itemsize * 2 * Cin * Cout
    vmem_limit = int(min(max(tile_bytes + (8 << 20), 16 << 20), vmem_cap))

    return pl.pallas_call(
        _pw_matmul_kernel,
        out_shape=jax.ShapeDtypeStruct((B, Cout, N), out_dtype),
        grid_spec=pltpu.PrefetchScalarGridSpec(
            num_scalar_prefetch=0,
            grid=grid,
            in_specs=[
                # Tiny weight: constant-index full block, stays resident in VMEM.
                pl.BlockSpec((Cout, Cin), lambda b, j: (0, 0)),
                # Activations: batch squeezed, channels on sublanes, spatial on lanes.
                pl.BlockSpec((None, Cin, tn), lambda b, j: (b, 0, j)),
            ],
            out_specs=pl.BlockSpec((None, Cout, tn), lambda b, j: (b, 0, j)),
        ),
        compiler_params=pltpu.CompilerParams(
            dimension_semantics=("parallel", "parallel"),
            vmem_limit_bytes=vmem_limit,
        ),
        cost_estimate=pl.CostEstimate(
            flops=2 * B * N * Cin * Cout,
            transcendentals=0,
            bytes_accessed=itemsize * B * N * (Cin + Cout) + w_itemsize * Cin * Cout,
        ),
    )(w, x)


def _pw_matmul_ktiled(w, x, out_dtype, tk, budget_bytes, vmem_cap, multi_core):
    """Same contract as _pw_matmul_single, but tiles the Cin reduction (tk)."""
    B, Cin, N = x.shape
    Cout = w.shape[0]
    assert Cin % tk == 0
    itemsize = jnp.dtype(x.dtype).itemsize
    w_itemsize = jnp.dtype(w.dtype).itemsize

    # Fixed cost: double-buffered (Cout, tk) weight tile.  Per spatial column:
    # double-buffered x (tk) + out (Cout) columns + single f32 acc column.
    fixed = w_itemsize * 2 * Cout * tk
    per_col = itemsize * 2 * (tk + Cout) + 4 * Cout
    tn = max(128, (max(budget_bytes - fixed, 0) // per_col) // 128 * 128)
    tn = min(tn, _round_up(N, 128))
    tn = _balance_tn(tn, N, B, multi_core)

    grid = (B, _cdiv(N, tn), Cin // tk)  # reduction axis last, "arbitrary"
    tile_bytes = fixed + itemsize * 2 * tn * (tk + Cout) + 4 * Cout * tn
    vmem_limit = int(min(max(tile_bytes + (8 << 20), 16 << 20), vmem_cap))

    return pl.pallas_call(
        _pw_matmul_ktiled_kernel,
        out_shape=jax.ShapeDtypeStruct((B, Cout, N), out_dtype),
        grid_spec=pltpu.PrefetchScalarGridSpec(
            num_scalar_prefetch=0,
            grid=grid,
            in_specs=[
                pl.BlockSpec((Cout, tk), lambda b, j, k: (0, k)),
                pl.BlockSpec((None, tk, tn), lambda b, j, k: (b, k, j)),
            ],
            out_specs=pl.BlockSpec((None, Cout, tn), lambda b, j, k: (b, 0, j)),
            scratch_shapes=[pltpu.VMEM((Cout, tn), jnp.float32)],
        ),
        compiler_params=pltpu.CompilerParams(
            dimension_semantics=("parallel", "parallel", "arbitrary"),
            vmem_limit_bytes=vmem_limit,
        ),
        cost_estimate=pl.CostEstimate(
            flops=2 * B * N * Cin * Cout,
            transcendentals=0,
            bytes_accessed=itemsize * B * N * (Cin + Cout) + w_itemsize * Cin * Cout,
        ),
    )(w, x)


_K_TILE = 512  # Cin-reduction tile for the large-channel path.


def _pw_matmul(w, x, out_dtype=None):
    """w: (Cout, Cin), x: (B, Cin, N) -> (B, Cout, N) via Pallas matmul."""
    _, Cin, _ = x.shape
    out_dtype = x.dtype if out_dtype is None else out_dtype
    budget, vmem_cap, multi_core = _vmem_plan()
    # Large channel counts: tile the reduction so the resident weight and the
    # full-Cin activation column don't squeeze the spatial (lane) tile.
    if Cin >= 1024 and Cin % _K_TILE == 0:
        return _pw_matmul_ktiled(w, x, out_dtype, _K_TILE, budget, vmem_cap, multi_core)
    return _pw_matmul_single(w, x, out_dtype, budget, vmem_cap, multi_core)


# ----------------------------------------------------------------------------
# Module-level ops
# ----------------------------------------------------------------------------

def build_pw_filters(pw, g):
    """pw: (c2, c1, g) -> (c2*g, c1*g), matching the torch roll/stack/view."""
    c2, c1, _ = pw.shape
    # torch.roll(pw, i, dims=-3)[..., k] == pw[..., (k - i) % g]
    rolled = jnp.stack([jnp.roll(pw, i, axis=-1) for i in range(g)], axis=1)  # (c2, g, c1, g)
    return rolled.reshape(c2 * g, c1 * g)


def pointwise_rre_conv(x, pw, g, compute_dtype=None):
    """x: (B, c1, g, H, W); pw: (c2, c1, g) -> (B, c2, g, H, W).

    compute_dtype: optionally run I/O in e.g. bf16 (accumulation stays f32);
    halves HBM traffic for this memory-bound op when the model tolerates it.
    """
    B, c1, g_in, H, W = x.shape
    assert g_in == g
    c2 = pw.shape[0]
    Cin, N = c1 * g, H * W

    Wmat = build_pw_filters(pw, g)          # (Cout, Cin)
    x_r = x.reshape(B, Cin, N)              # pure reshape, channels already first
    if compute_dtype is not None:
        Wmat = Wmat.astype(compute_dtype)
        x_r = x_r.astype(compute_dtype)
    out = _pw_matmul(Wmat, x_r, out_dtype=x_r.dtype)   # (B, Cout, N)
    return out.reshape(B, c2, g, H, W)


if __name__ == "__main__":
    key = jax.random.PRNGKey(0)
    kx, kw, kx2, kw2 = jax.random.split(key, 4)

    # --- Small-channel case (module defaults: g_order = 4) ------------------
    B, c1, c2, g, H, Wsp = 2, 4, 8, 4, 16, 16
    x = jax.random.normal(kx, (B, c1, g, H, Wsp), dtype=jnp.float32)
    # Deterministic kaiming_uniform_(a=sqrt(5)) equivalent for (c2, c1, g, 1, 1):
    # fan_in = c1*g, gain = sqrt(2/(1+5)), bound = gain*sqrt(3/fan_in) = 1/sqrt(fan_in)
    fan_in = c1 * g
    bound = 1.0 / (fan_in ** 0.5)
    pw = jax.random.uniform(kw, (c2, c1, g), minval=-bound, maxval=bound,
                            dtype=jnp.float32)

    out = jax.block_until_ready(pointwise_rre_conv(x, pw, g))
    Wmat = build_pw_filters(pw, g)
    ref = jnp.einsum("oc,bchw->bohw", Wmat, x.reshape(B, c1 * g, H, Wsp),
                     precision=jax.lax.Precision.HIGHEST).reshape(B, c2, g, H, Wsp)
    assert out.shape == (B, c2, g, H, Wsp)
    assert jnp.allclose(out, ref, atol=1e-4, rtol=1e-4)

    # --- Large-channel case: exercises the Cin-tiled accumulator path -------
    Bb, c1b, c2b, Hb, Wb = 1, 256, 256, 16, 16     # Cin = Cout = 1024
    xb = jax.random.normal(kx2, (Bb, c1b, g, Hb, Wb), dtype=jnp.float32)
    boundb = 1.0 / ((c1b * g) ** 0.5)
    pwb = jax.random.uniform(kw2, (c2b, c1b, g), minval=-boundb, maxval=boundb,
                             dtype=jnp.float32)
    outb = jax.block_until_ready(pointwise_rre_conv(xb, pwb, g))
    Wmatb = build_pw_filters(pwb, g)
    refb = jnp.einsum("oc,bchw->bohw", Wmatb, xb.reshape(Bb, c1b * g, Hb, Wb),
                      precision=jax.lax.Precision.HIGHEST).reshape(Bb, c2b, g, Hb, Wb)
    assert outb.shape == (Bb, c2b, g, Hb, Wb)
    assert jnp.allclose(outb, refb, atol=1e-3, rtol=1e-3)

    print("KERNEL_OK")
</pallas_src>

<mosaic_0001>
module attributes {stable_mosaic.version = 11 : i64} {
  func.func @_pw_matmul_kernel(%arg0: i32, %arg1: i32, %arg2: memref<32x16xf32, #tpu.memory_space<vmem>>, %arg3: memref<1x16x128xf32, #tpu.memory_space<vmem>>, %arg4: memref<1x32x128xf32, #tpu.memory_space<vmem>>) attributes {dimension_semantics = [#tpu.dimension_semantics<parallel>, #tpu.dimension_semantics<parallel>], iteration_bounds = array<i64: 2, 2>, scalar_prefetch = 0 : i64, scratch_operands = 0 : i64, tpu.core_type = #tpu.core_type<tc>, window_params = [{pipeline_mode = #tpu.pipeline_mode<synchronous>, transform_indices = @transform_0, window_bounds = array<i64: 32, 16>}, {transform_indices = @transform_1, window_bounds = array<i64: 1, 16, 128>}, {transform_indices = @transform_2, window_bounds = array<i64: 1, 32, 128>}]} {
    %c0 = arith.constant 0 : index
    %c0_0 = arith.constant 0 : index
    %0 = vector.load %arg2[%c0, %c0_0] : memref<32x16xf32, #tpu.memory_space<vmem>>, vector<32x16xf32>
    %c0_1 = arith.constant 0 : index
    %c0_2 = arith.constant 0 : index
    %c0_3 = arith.constant 0 : index
    %1 = vector.load %arg3[%c0_1, %c0_2, %c0_3] : memref<1x16x128xf32, #tpu.memory_space<vmem>>, vector<1x16x128xf32>
    %2 = vector.shape_cast %1 : vector<1x16x128xf32> to vector<16x128xf32>
    %cst = arith.constant dense<0.000000e+00> : vector<32x128xf32>
    %3 = tpu.matmul %0, %2, %cst {dimension_numbers = #tpu.dot_dimension_numbers<[1], [0], [0], [1], [0, 0, 1, 1], [], []>, precision = #tpu.contract_precision<fp32>} : vector<32x16xf32>, vector<16x128xf32>, vector<32x128xf32> -> vector<32x128xf32>
    %c0_4 = arith.constant 0 : index
    %c0_5 = arith.constant 0 : index
    %c0_6 = arith.constant 0 : index
    %4 = vector.load %arg4[%c0_4, %c0_5, %c0_6] : memref<1x32x128xf32, #tpu.memory_space<vmem>>, vector<1x32x128xf32>
    %5 = vector.shape_cast %4 : vector<1x32x128xf32> to vector<32x128xf32>
    %6 = vector.shape_cast %3 : vector<32x128xf32> to vector<1x32x128xf32>
    tpu.vector_store %arg4[%c0_4, %c0_5, %c0_6], %6 {strides = array<i32>} : memref<1x32x128xf32, #tpu.memory_space<vmem>>, vector<1x32x128xf32>,
    return
  }
  func.func @transform_0(%arg0: i32, %arg1: i32) -> (i32, i32) {
    %c0_i32 = arith.constant 0 : i32
    %c0_i32_0 = arith.constant 0 : i32
    %c0_i32_1 = arith.constant 0 : i32
    return %c0_i32, %c0_i32_0 : i32, i32
  }
  func.func @transform_1(%arg0: i32, %arg1: i32) -> (i32, i32, i32) {
    %c0_i32 = arith.constant 0 : i32
    %c0_i32_0 = arith.constant 0 : i32
    return %arg0, %c0_i32, %arg1 : i32, i32, i32
  }
  func.func @transform_2(%arg0: i32, %arg1: i32) -> (i32, i32, i32) {
    %c0_i32 = arith.constant 0 : i32
    %c0_i32_0 = arith.constant 0 : i32
    return %arg0, %c0_i32, %arg1 : i32, i32, i32
  }
}

</mosaic_0001>

<llo_original>
// kernel: tpu_custom_call.1
$region0: #{tpu_custom_call.1}
  #allocation0 [shape = 'u32[]', space=smem, size = 0x4, offset = 0x4, fixed_abs, tag = 'smem constant byte address 0x4 - core index']
  #allocation1 [shape = 'u32[144,128]{1,0:T(1,128)}', space=vmem, size = 0x12000, scoped, tag = 'internal scratch']
  %s0 = inlined_call_operand.vmem [shape: f32[32,16], index: 0, kind: input, shape index: {}]
  %s1 = inlined_call_operand.hbm [shape: f32[2,16,256], index: 1, kind: input, shape index: {}]
  %s2 = inlined_call_operand.hbm [shape: f32[2,32,256], index: 2, kind: output, shape index: {}]
  %s3 = sld [smem:[#allocation0]]
  $region45: #{tpu_custom_call.1} parent=0
    _
  %s5 = ssub.s32 1, %s3
  %s6 = scalar_select 0, %s5, %s3
  $region1: #{tpu_custom_call.1} parent=0
    #allocation2 [shape = 'u8[16384]{0}', space=vmem, size = 0x4000, scoped, tag = 'input window, operand 1']
    #allocation3 [shape = 's32[2]{0}', space=sflag, size = 0x8, scoped, tag = 'scoped memory for tpu_custom_call.1']
    #allocation4 [shape = 's32[2]{0}', space=sflag, size = 0x8, scoped, tag = 'scoped memory for tpu_custom_call.1']
    #allocation5 [shape = 'u8[32768]{0}', space=vmem, size = 0x8000, scoped, tag = 'output window, operand 0']
    %7 = vsyncpa [#allocation3], 0
    %s8 = scalar_lea.sflag [#allocation3], 1
    %9 = vsyncpa %s8, 0
    %10 = vsyncpa [#allocation4], 0
    %s11 = scalar_lea.sflag [#allocation4], 1
    %12 = vsyncpa %s11, 0
    loop: start=0, step=1, limit=6
    $region2: #{tpu_custom_call.1} parent=1 // loop_pre_header
      _
    $region3: #{tpu_custom_call.1} parent=1 // loop_header
      %s14 = sphi 0, %s18
      %p15 = scmp.ge.s32.totalorder %s14, 6
      %s21 = sphi 0, %s33
      %s22 = sphi 0, %s29
      %s23 = sphi 0, %s21
      %s24 = sphi 0, %s22
      %s25 = sphi 0, %s23
      %s26 = sphi 0, %s24
      %s34 = sphi 0, %s34
      %s36 = sphi 0, %s34
      %s37 = sphi 0, %s36
      %s51 = sphi 0, %s37
      %s59 = sphi 0, %s61
      %s62 = sphi 0, %s59
      %s63 = sphi 0, %s62
      %s79 = sphi 0, %s63
      %s87 = sphi 0, %s89
      %s90 = sphi 0, %s87
      %s91 = sphi 0, %s90
      %s107 = sphi 0, %s91
    $region4: #{tpu_custom_call.1} parent=1 // loop_header_branch
      %17 = sbr.rel (%p15) target = $region8
    $region5: #{tpu_custom_call.1} parent=1 // loop_body
      %s19 = ssub.s32 %s14, 1
      %s20 = ssub.s32 %s14, 2
      %s27 = sadd.s32 1, %s22
      %p28 = scmp.ge.s32.totalorder %s27, 2
      %s29 = scalar_select %p28, 0, %s27
      %s30 = sadd.s32 1, %s21
      %s31 = scalar_select %p28, %s30, %s21
      %p32 = scmp.ge.s32.totalorder %s31, 2
      %s33 = scalar_select %p32, 0, %s31
      %s35 = sadd.s32 %s34, 1
      %p38 = scmp.eq.s32.totalorder %s14, 3
      %p39 = scmp.ne.s32.totalorder %s34, %s36
      %p40 = scmp.eq.s32.totalorder %s14, 0
      %p41 = por %p39, %p40
      %p42 = scmp.ne.s32.totalorder %s34, %s36
      %p43 = scmp.eq.s32.totalorder %s19, 3
      %p44 = por %p42, %p43
      %p45 = scmp.ne.s32.totalorder %s36, %s37
      %p46 = scmp.eq.s32.totalorder %s19, 0
      %p47 = por %p45, %p46
      %p48 = scmp.ne.s32.totalorder %s36, %s37
      %p49 = scmp.eq.s32.totalorder %s20, 3
      %p50 = por %p48, %p49
      %p52 = scmp.ne.s32.totalorder %s37, %s51
      %p53 = scmp.eq.s32.totalorder %s20, 0
      %p54 = por %p52, %p53
      %s55 = ssub.s32 %s21, %s33
      %s56 = ssub.s32 %s22, %s29
      %s57 = sor.u32 %s55, %s56
      %p58 = scmp.eq.s32.totalorder %s57, 0
      %s60 = sadd.s32 %s59, 1
      %s61 = scalar_select %p58, %s59, %s60
      %p64 = pneg %p58
      %p65 = scmp.eq.s32.totalorder %s14, 3
      %p66 = por %p64, %p65
      %p67 = scmp.ne.s32.totalorder %s59, %s62
      %p68 = scmp.eq.s32.totalorder %s14, 0
      %p69 = por %p67, %p68
      %p70 = scmp.ne.s32.totalorder %s59, %s62
      %p71 = scmp.eq.s32.totalorder %s19, 3
      %p72 = por %p70, %p71
      %p73 = scmp.ne.s32.totalorder %s62, %s63
      %p74 = scmp.eq.s32.totalorder %s19, 0
      %p75 = por %p73, %p74
      %p76 = scmp.ne.s32.totalorder %s62, %s63
      %p77 = scmp.eq.s32.totalorder %s20, 3
      %p78 = por %p76, %p77
      %p80 = scmp.ne.s32.totalorder %s63, %s79
      %p81 = scmp.eq.s32.totalorder %s20, 0
      %p82 = por %p80, %p81
      %s83 = ssub.s32 %s21, %s33
      %s84 = ssub.s32 %s22, %s29
      %s85 = sor.u32 %s83, %s84
      %p86 = scmp.eq.s32.totalorder %s85, 0
      %s88 = sadd.s32 %s87, 1
      %s89 = scalar_select %p86, %s87, %s88
      %p92 = pneg %p86
      %p93 = scmp.eq.s32.totalorder %s14, 3
      %p94 = por %p92, %p93
      %p95 = scmp.ne.s32.totalorder %s87, %s90
      %p96 = scmp.eq.s32.totalorder %s14, 0
      %p97 = por %p95, %p96
      %p98 = scmp.ne.s32.totalorder %s87, %s90
      %p99 = scmp.eq.s32.totalorder %s19, 3
      %p100 = por %p98, %p99
      %p101 = scmp.ne.s32.totalorder %s90, %s91
      %p102 = scmp.eq.s32.totalorder %s19, 0
      %p103 = por %p101, %p102
      %p104 = scmp.ne.s32.totalorder %s90, %s91
      %p105 = scmp.eq.s32.totalorder %s20, 3
      %p106 = por %p104, %p105
      %p108 = scmp.ne.s32.totalorder %s91, %s107
      %p109 = scmp.eq.s32.totalorder %s20, 0
      %p110 = por %p108, %p109
      %p111 = scmp.le.s32.totalorder 1, %s14
      %p112 = scmp.lt.s32.totalorder %s14, 5
      %p113 = pnand %p111, %p112
      %p114 = pneg %p113
      // Predicated region
      $region9: #{tpu_custom_call.1} parent=5 // pred_check
        _
      $region10: #{tpu_custom_call.1} parent=5 // pred_check_branch
        %116 = sbr.rel (%p113) target = $region12
      $region11: #{tpu_custom_call.1} parent=5 // pred_region
        %s117 = ssub.s32 %s14, 1
        // Predicated region
        $region13: #{tpu_custom_call.1} parent=11 // pred_check
          %p118 = pneg %p47
        $region14: #{tpu_custom_call.1} parent=11 // pred_check_branch
          %120 = sbr.rel (%p118) target = $region16
        $region15: #{tpu_custom_call.1} parent=11 // pred_region
          _
        $region16: #{tpu_custom_call.1} parent=11 // pred_fallthru
          _
      $region12: #{tpu_custom_call.1} parent=5 // pred_fallthru
        _
      %p121 = scmp.lt.s32.totalorder %s14, 4
      // Predicated region
      $region17: #{tpu_custom_call.1} parent=5 // pred_check
        %p122 = pneg %p121
      $region18: #{tpu_custom_call.1} parent=5 // pred_check_branch
        %124 = sbr.rel (%p122) target = $region20
      $region19: #{tpu_custom_call.1} parent=5 // pred_region
        // Predicated region
        $region21: #{tpu_custom_call.1} parent=19 // pred_check
          %p125 = pneg %p69
        $region22: #{tpu_custom_call.1} parent=19 // pred_check_branch
          %127 = sbr.rel (%p125) target = $region24
        $region23: #{tpu_custom_call.1} parent=19 // pred_region
          %s128 = sand.u32 %s59, 1
          %s129 = scalar_lea.sflag [#allocation3], %s128
          %s130 = sand.u32 %s59, 1
          %s131 = smul.addr %s130, 16
          %s132 = scalar_lea.vmem [#allocation2], %s131
          %s134 = ssub.s32 256, 256
          %135 = vsyncadd %s129, %s134
          %s136 = smul.addr %s21, 4
          %s137 = sadd.s32 %s22, %s136
          %s138 = smul.addr %s137, 128
          %s139 = scalar_lea.hbm %s1, %s138
          %s140 = sshll.u32 %s132, 4
          %s141 = int_to_ptr.vmem [resolvable:$true] %s140
          %146 = dma.hbm_to_vmem [thread:$0]  %s139, 256, %s141, %s129, 256, 128, 8
        $region24: #{tpu_custom_call.1} parent=19 // pred_fallthru
          _
      $region20: #{tpu_custom_call.1} parent=5 // pred_fallthru
        _
      %p147 = scmp.le.s32.totalorder 1, %s14
      %p148 = scmp.lt.s32.totalorder %s14, 5
      %p149 = pnand %p147, %p148
      %p150 = pneg %p149
      // Predicated region
      $region25: #{tpu_custom_call.1} parent=5 // pred_check
        _
      $region26: #{tpu_custom_call.1} parent=5 // pred_check_branch
        %152 = sbr.rel (%p149) target = $region28
      $region27: #{tpu_custom_call.1} parent=5 // pred_region
        %s153 = ssub.s32 %s14, 1
        %s154 = sand.u32 %s62, 1
        %s155 = scalar_lea.sflag [#allocation3], %s154
        %s156 = sand.u32 %s62, 1
        %s157 = smul.addr %s156, 16
        %s158 = scalar_lea.vmem [#allocation2], %s157
        // Predicated region
        $region29: #{tpu_custom_call.1} parent=27 // pred_check
          %p159 = pneg %p75
        $region30: #{tpu_custom_call.1} parent=27 // pred_check_branch
          %161 = sbr.rel (%p159) target = $region32
        $region31: #{tpu_custom_call.1} parent=27 // pred_region
          %162 = dma.done %s155, 256
        $region32: #{tpu_custom_call.1} parent=27 // pred_fallthru
          _
        %p163 = pneg %p47
        %p164 = pneg %p44
        %s165 = sand.u32 %s62, 1
        %s166 = scalar_lea.sflag [#allocation3], %s165
        %s167 = sand.u32 %s62, 1
        %s168 = smul.addr %s167, 16
        %s169 = scalar_lea.vmem [#allocation2], %s168
        %p170 = pneg %p75
        %p171 = pneg %p72
        %p172 = pneg %p103
        %p173 = pneg %p100
        %s174 = sand.u32 %s90, 1
        %s175 = scalar_lea.sflag [#allocation4], %s174
        %s176 = sand.u32 %s90, 1
        %s177 = smul.addr %s176, 32
        %s178 = scalar_lea.vmem [#allocation5], %s177
        %v179 = vld [vmem:[%s0] sm:$0xff]
        %v180 = vld [vmem:[%s0 + $0x8] sm:$0xff]
        %v181 = vld [vmem:[%s0 + $0x10] sm:$0xff]
        %v182 = vld [vmem:[%s0 + $0x18] sm:$0xff]
        %v183 = vld [vmem:[%s158] sm:$0xff]
        %v184 = vld [vmem:[%s158 + $0x8] sm:$0xff]
        %vm185 = vcmask 130048
        %v187 = vsel %vm185, %v179, 0
        %v190 = vsel %vm185, %v180, 0
        %v193 = vsel %vm185, %v181, 0
        %v196 = vsel %vm185, %v182, 0
        %198 = vmatprep.subr.mxu0 0.0
        %v199 = vand.u32 %v183, 4294901760
        %200 = vmatpush1.msra.mxu0 %v199
        %201 = vmatprep.subr.mxu0 0.0
        %v202 = vand.u32 %v184, 4294901760
        %203 = vmatpush1.msra.mxu0 %v202
        %204 = vmatprep.subr.mxu0 0.0
        %205 = vmatpush1.msra.mxu0 0.0
        %206 = vmatprep.subr.mxu0 0.0
        %207 = vmatpush1.msra.mxu0 0.0
        %208 = vmatprep.subr.mxu0 0.0
        %209 = vmatpush1.msra.mxu0 0.0
        %210 = vmatprep.subr.mxu0 0.0
        %211 = vmatpush1.msra.mxu0 0.0
        %212 = vmatprep.subr.mxu0 0.0
        %213 = vmatpush1.msra.mxu0 0.0
        %214 = vmatprep.subr.mxu0 0.0
        %215 = vmatpush1.msra.mxu0 0.0
        %216 = vmatprep.subr.mxu0 0.0
        %217 = vmatpush1.msra.mxu0 0.0
        %218 = vmatprep.subr.mxu0 0.0
        %219 = vmatpush1.msra.mxu0 0.0
        %220 = vmatprep.subr.mxu0 0.0
        %221 = vmatpush1.msra.mxu0 0.0
        %222 = vmatprep.subr.mxu0 0.0
        %223 = vmatpush1.msra.mxu0 0.0
        %224 = vmatprep.subr.mxu0 0.0
        %225 = vmatpush1.msra.mxu0 0.0
        %226 = vmatprep.subr.mxu0 0.0
        %227 = vmatpush1.msra.mxu0 0.0
        %228 = vmatprep.subr.mxu0 0.0
        %229 = vmatpush1.msra.mxu0 0.0
        %230 = vmatprep.subr.mxu0 0.0
        %231 = vmatpush1.msra.mxu0 0.0
        %232 = vmatprep.subr.mxu0 0.0
        %233 = vmatpush1.msra.mxu0 0.0
        %234 = vmatprep.subr.mxu0 0.0
        %235 = vmatpush1.msra.mxu0 0.0
        %236 = vmatprep.subr.mxu0 0.0
        %237 = vmatpush1.msra.mxu0 0.0
        %238 = vmatprep.subr.mxu0 0.0
        %239 = vmatpush1.msra.mxu0 0.0
        %240 = vmatprep.subr.mxu0 0.0
        %241 = vmatpush1.msra.mxu0 0.0
        %242 = vmatprep.subr.mxu0 0.0
        %243 = vmatpush1.msra.mxu0 0.0
        %244 = vmatprep.subr.mxu0 0.0
        %245 = vmatpush1.msra.mxu0 0.0
        %246 = vmatprep.subr.mxu0 0.0
        %247 = vmatpush1.msra.mxu0 0.0
        %248 = vmatprep.subr.mxu0 0.0
        %249 = vmatpush1.msra.mxu0 0.0
        %250 = vmatprep.subr.mxu0 0.0
        %251 = vmatpush1.msra.mxu0 0.0
        %252 = vmatprep.subr.mxu0 0.0
        %253 = vmatpush1.msra.mxu0 0.0
        %254 = vmatprep.subr.mxu0 0.0
        %255 = vmatpush1.msra.mxu0 0.0
        %256 = vmatprep.subr.mxu0 0.0
        %257 = vmatpush1.msra.mxu0 0.0
        %258 = vmatprep.subr.mxu0 0.0
        %259 = vmatpush1.msra.mxu0 0.0
        %260 = vmatprep.subr.mxu0 0.0
        %261 = vmatpush1.msra.mxu0 0.0
        %262 = vmatprep.subr.mxu0 0.0
        %263 = vmatpush1.msra.mxu0 0.0
        %264 = vmatprep.mubr.f32.mxu0 0.0
        %v265 = vand.u32 %v187, 4294901760
        %v266 = vsub.f32 %v187, %v265
        %v267 = vand.u32 %v266, 4294901760
        %v268 = vsub.f32 %v266, %v267
        %v269 = vand.u32 %v268, 4294901760
        %270 = vmatmul.mubr.f32.gmra.mrb[0].mxu0 %v269
        %v271 = vpop.f32.mrb[0].mxu0
        %v272 = vadd.f32 0.0, %v271
        %v273 = vpop.f32.mrb[0].mxu0
        %274 = vmatprep.mubr.f32.mxu0 0.0
        %v275 = vand.u32 %v190, 4294901760
        %v276 = vsub.f32 %v190, %v275
        %v277 = vand.u32 %v276, 4294901760
        %v278 = vsub.f32 %v276, %v277
        %v279 = vand.u32 %v278, 4294901760
        %280 = vmatmul.mubr.f32.gmra.mrb[0].mxu0 %v279
        %v281 = vpop.f32.mrb[0].mxu0
        %v282 = vadd.f32 0.0, %v281
        %v283 = vpop.f32.mrb[0].mxu0
        %284 = vmatprep.mubr.f32.mxu0 0.0
        %v285 = vand.u32 %v193, 4294901760
        %v286 = vsub.f32 %v193, %v285
        %v287 = vand.u32 %v286, 4294901760
        %v288 = vsub.f32 %v286, %v287
        %v289 = vand.u32 %v288, 4294901760
        %290 = vmatmul.mubr.f32.gmra.mrb[0].mxu0 %v289
        %v291 = vpop.f32.mrb[0].mxu0
        %v292 = vadd.f32 0.0, %v291
        %v293 = vpop.f32.mrb[0].mxu0
        %294 = vmatprep.mubr.f32.mxu0 0.0
        %v295 = vand.u32 %v196, 4294901760
        %v296 = vsub.f32 %v196, %v295
        %v297 = vand.u32 %v296, 4294901760
        %v298 = vsub.f32 %v296, %v297
        %v299 = vand.u32 %v298, 4294901760
        %300 = vmatmul.mubr.f32.gmra.mrb[0].mxu0 %v299
        %v301 = vpop.f32.mrb[0].mxu0
        %v302 = vadd.f32 0.0, %v301
        %v303 = vpop.f32.mrb[0].mxu0
        %304 = vdwg.mxu0
        %305 = vmatprep.subr.mxu0 0.0
        %v306 = vand.u32 %v183, 4294901760
        %v307 = vsub.f32 %v183, %v306
        %v308 = vand.u32 %v307, 4294901760
        %v309 = vsub.f32 %v307, %v308
        %v310 = vand.u32 %v309, 4294901760
        %311 = vmatpush1.msra.mxu0 %v310
        %312 = vmatprep.subr.mxu0 0.0
        %v313 = vand.u32 %v184, 4294901760
        %v314 = vsub.f32 %v184, %v313
        %v315 = vand.u32 %v314, 4294901760
        %v316 = vsub.f32 %v314, %v315
        %v317 = vand.u32 %v316, 4294901760
        %318 = vmatpush1.msra.mxu0 %v317
        %319 = vmatprep.subr.mxu0 0.0
        %320 = vmatpush1.msra.mxu0 0.0
        %321 = vmatprep.subr.mxu0 0.0
        %322 = vmatpush1.msra.mxu0 0.0
        %323 = vmatprep.subr.mxu0 0.0
        %324 = vmatpush1.msra.mxu0 0.0
        %325 = vmatprep.subr.mxu0 0.0
        %326 = vmatpush1.msra.mxu0 0.0
        %327 = vmatprep.subr.mxu0 0.0
        %328 = vmatpush1.msra.mxu0 0.0
        %329 = vmatprep.subr.mxu0 0.0
        %330 = vmatpush1.msra.mxu0 0.0
        %331 = vmatprep.subr.mxu0 0.0
        %332 = vmatpush1.msra.mxu0 0.0
        %333 = vmatprep.subr.mxu0 0.0
        %334 = vmatpush1.msra.mxu0 0.0
        %335 = vmatprep.subr.mxu0 0.0
        %336 = vmatpush1.msra.mxu0 0.0
        %337 = vmatprep.subr.mxu0 0.0
        %338 = vmatpush1.msra.mxu0 0.0
        %339 = vmatprep.subr.mxu0 0.0
        %340 = vmatpush1.msra.mxu0 0.0
        %341 = vmatprep.subr.mxu0 0.0
        %342 = vmatpush1.msra.mxu0 0.0
        %343 = vmatprep.subr.mxu0 0.0
        %344 = vmatpush1.msra.mxu0 0.0
        %345 = vmatprep.subr.mxu0 0.0
        %346 = vmatpush1.msra.mxu0 0.0
        %347 = vmatprep.subr.mxu0 0.0
        %348 = vmatpush1.msra.mxu0 0.0
        %349 = vmatprep.subr.mxu0 0.0
        %350 = vmatpush1.msra.mxu0 0.0
        %351 = vmatprep.subr.mxu0 0.0
        %352 = vmatpush1.msra.mxu0 0.0
        %353 = vmatprep.subr.mxu0 0.0
        %354 = vmatpush1.msra.mxu0 0.0
        %355 = vmatprep.subr.mxu0 0.0
        %356 = vmatpush1.msra.mxu0 0.0
        %357 = vmatprep.subr.mxu0 0.0
        %358 = vmatpush1.msra.mxu0 0.0
        %359 = vmatprep.subr.mxu0 0.0
        %360 = vmatpush1.msra.mxu0 0.0
        %361 = vmatprep.subr.mxu0 0.0
        %362 = vmatpush1.msra.mxu0 0.0
        %363 = vmatprep.subr.mxu0 0.0
        %364 = vmatpush1.msra.mxu0 0.0
        %365 = vmatprep.subr.mxu0 0.0
        %366 = vmatpush1.msra.mxu0 0.0
        %367 = vmatprep.subr.mxu0 0.0
        %368 = vmatpush1.msra.mxu0 0.0
        %369 = vmatprep.subr.mxu0 0.0
        %370 = vmatpush1.msra.mxu0 0.0
        %371 = vmatprep.subr.mxu0 0.0
        %372 = vmatpush1.msra.mxu0 0.0
        %373 = vmatprep.subr.mxu0 0.0
        %374 = vmatpush1.msra.mxu0 0.0
        %375 = vmatprep.subr.mxu0 0.0
        %376 = vmatpush1.msra.mxu0 0.0
        %377 = vmatprep.subr.mxu0 0.0
        %378 = vmatpush1.msra.mxu0 0.0
        %379 = vmatprep.mubr.f32.mxu0 0.0
        %v380 = vand.u32 %v187, 4294901760
        %381 = vmatmul.mubr.f32.gmra.mrb[0].mxu0 %v380
        %v382 = vpop.f32.mrb[0].mxu0
        %v383 = vadd.f32 %v272, %v382
        %v384 = vpop.f32.mrb[0].mxu0
        %385 = vmatprep.mubr.f32.mxu0 0.0
        %v386 = vand.u32 %v190, 4294901760
        %387 = vmatmul.mubr.f32.gmra.mrb[0].mxu0 %v386
        %v388 = vpop.f32.mrb[0].mxu0
        %v389 = vadd.f32 %v282, %v388
        %v390 = vpop.f32.mrb[0].mxu0
        %391 = vmatprep.mubr.f32.mxu0 0.0
        %v392 = vand.u32 %v193, 4294901760
        %393 = vmatmul.mubr.f32.gmra.mrb[0].mxu0 %v392
        %v394 = vpop.f32.mrb[0].mxu0
        %v395 = vadd.f32 %v292, %v394
        %v396 = vpop.f32.mrb[0].mxu0
        %397 = vmatprep.mubr.f32.mxu0 0.0
        %v398 = vand.u32 %v196, 4294901760
        %399 = vmatmul.mubr.f32.gmra.mrb[0].mxu0 %v398
        %v400 = vpop.f32.mrb[0].mxu0
        %v401 = vadd.f32 %v302, %v400
        %v402 = vpop.f32.mrb[0].mxu0
        %403 = vdwg.mxu0
        %404 = vmatprep.subr.mxu0 0.0
        %v405 = vand.u32 %v183, 4294901760
        %v406 = vsub.f32 %v183, %v405
        %407 = vmatpush1.msra.mxu0 %v406
        %408 = vmatprep.subr.mxu0 0.0
        %v409 = vand.u32 %v184, 4294901760
        %v410 = vsub.f32 %v184, %v409
        %411 = vmatpush1.msra.mxu0 %v410
        %412 = vmatprep.subr.mxu0 0.0
        %413 = vmatpush1.msra.mxu0 0.0
        %414 = vmatprep.subr.mxu0 0.0
        %415 = vmatpush1.msra.mxu0 0.0
        %416 = vmatprep.subr.mxu0 0.0
        %417 = vmatpush1.msra.mxu0 0.0
        %418 = vmatprep.subr.mxu0 0.0
        %419 = vmatpush1.msra.mxu0 0.0
        %420 = vmatprep.subr.mxu0 0.0
        %421 = vmatpush1.msra.mxu0 0.0
        %422 = vmatprep.subr.mxu0 0.0
        %423 = vmatpush1.msra.mxu0 0.0
        %424 = vmatprep.subr.mxu0 0.0
        %425 = vmatpush1.msra.mxu0 0.0
        %426 = vmatprep.subr.mxu0 0.0
        %427 = vmatpush1.msra.mxu0 0.0
        %428 = vmatprep.subr.mxu0 0.0
        %429 = vmatpush1.msra.mxu0 0.0
        %430 = vmatprep.subr.mxu0 0.0
        %431 = vmatpush1.msra.mxu0 0.0
        %432 = vmatprep.subr.mxu0 0.0
        %433 = vmatpush1.msra.mxu0 0.0
        %434 = vmatprep.subr.mxu0 0.0
        %435 = vmatpush1.msra.mxu0 0.0
        %436 = vmatprep.subr.mxu0 0.0
        %437 = vmatpush1.msra.mxu0 0.0
        %438 = vmatprep.subr.mxu0 0.0
        %439 = vmatpush1.msra.mxu0 0.0
        %440 = vmatprep.subr.mxu0 0.0
        %441 = vmatpush1.msra.mxu0 0.0
        %442 = vmatprep.subr.mxu0 0.0
        %443 = vmatpush1.msra.mxu0 0.0
        %444 = vmatprep.subr.mxu0 0.0
        %445 = vmatpush1.msra.mxu0 0.0
        %446 = vmatprep.subr.mxu0 0.0
        %447 = vmatpush1.msra.mxu0 0.0
        %448 = vmatprep.subr.mxu0 0.0
        %449 = vmatpush1.msra.mxu0 0.0
        %450 = vmatprep.subr.mxu0 0.0
        %451 = vmatpush1.msra.mxu0 0.0
        %452 = vmatprep.subr.mxu0 0.0
        %453 = vmatpush1.msra.mxu0 0.0
        %454 = vmatprep.subr.mxu0 0.0
        %455 = vmatpush1.msra.mxu0 0.0
        %456 = vmatprep.subr.mxu0 0.0
        %457 = vmatpush1.msra.mxu0 0.0
        %458 = vmatprep.subr.mxu0 0.0
        %459 = vmatpush1.msra.mxu0 0.0
        %460 = vmatprep.subr.mxu0 0.0
        %461 = vmatpush1.msra.mxu0 0.0
        %462 = vmatprep.subr.mxu0 0.0
        %463 = vmatpush1.msra.mxu0 0.0
        %464 = vmatprep.subr.mxu0 0.0
        %465 = vmatpush1.msra.mxu0 0.0
        %466 = vmatprep.subr.mxu0 0.0
        %467 = vmatpush1.msra.mxu0 0.0
        %468 = vmatprep.subr.mxu0 0.0
        %469 = vmatpush1.msra.mxu0 0.0
        %470 = vmatprep.subr.mxu0 0.0
        %471 = vmatpush1.msra.mxu0 0.0
        %472 = vmatprep.mubr.f32.mxu0 0.0
        %v473 = vand.u32 %v187, 4294901760
        %v474 = vsub.f32 %v187, %v473
        %475 = vmatmul.mubr.f32.gmra.mrb[0].mxu0 %v474
        %v476 = vpop.f32.mrb[0].mxu0
        %v477 = vadd.f32 %v383, %v476
        %v478 = vpop.f32.mrb[0].mxu0
        %479 = vmatprep.mubr.f32.mxu0 0.0
        %v480 = vand.u32 %v190, 4294901760
        %v481 = vsub.f32 %v190, %v480
        %482 = vmatmul.mubr.f32.gmra.mrb[0].mxu0 %v481
        %v483 = vpop.f32.mrb[0].mxu0
        %v484 = vadd.f32 %v389, %v483
        %v485 = vpop.f32.mrb[0].mxu0
        %486 = vmatprep.mubr.f32.mxu0 0.0
        %v487 = vand.u32 %v193, 4294901760
        %v488 = vsub.f32 %v193, %v487
        %489 = vmatmul.mubr.f32.gmra.mrb[0].mxu0 %v488
        %v490 = vpop.f32.mrb[0].mxu0
        %v491 = vadd.f32 %v395, %v490
        %v492 = vpop.f32.mrb[0].mxu0
        %493 = vmatprep.mubr.f32.mxu0 0.0
        %v494 = vand.u32 %v196, 4294901760
        %v495 = vsub.f32 %v196, %v494
        %496 = vmatmul.mubr.f32.gmra.mrb[0].mxu0 %v495
        %v497 = vpop.f32.mrb[0].mxu0
        %v498 = vadd.f32 %v401, %v497
        %v499 = vpop.f32.mrb[0].mxu0
        %500 = vdwg.mxu0
        %501 = vmatprep.subr.mxu0 0.0
        %v502 = vand.u32 %v183, 4294901760
        %503 = vmatpush1.msra.mxu0 %v502
        %504 = vmatprep.subr.mxu0 0.0
        %v505 = vand.u32 %v184, 4294901760
        %506 = vmatpush1.msra.mxu0 %v505
        %507 = vmatprep.subr.mxu0 0.0
        %508 = vmatpush1.msra.mxu0 0.0
        %509 = vmatprep.subr.mxu0 0.0
        %510 = vmatpush1.msra.mxu0 0.0
        %511 = vmatprep.subr.mxu0 0.0
        %512 = vmatpush1.msra.mxu0 0.0
        %513 = vmatprep.subr.mxu0 0.0
        %514 = vmatpush1.msra.mxu0 0.0
        %515 = vmatprep.subr.mxu0 0.0
        %516 = vmatpush1.msra.mxu0 0.0
        %517 = vmatprep.subr.mxu0 0.0
        %518 = vmatpush1.msra.mxu0 0.0
        %519 = vmatprep.subr.mxu0 0.0
        %520 = vmatpush1.msra.mxu0 0.0
        %521 = vmatprep.subr.mxu0 0.0
        %522 = vmatpush1.msra.mxu0 0.0
        %523 = vmatprep.subr.mxu0 0.0
        %524 = vmatpush1.msra.mxu0 0.0
        %525 = vmatprep.subr.mxu0 0.0
        %526 = vmatpush1.msra.mxu0 0.0
        %527 = vmatprep.subr.mxu0 0.0
        %528 = vmatpush1.msra.mxu0 0.0
        %529 = vmatprep.subr.mxu0 0.0
        %530 = vmatpush1.msra.mxu0 0.0
        %531 = vmatprep.subr.mxu0 0.0
        %532 = vmatpush1.msra.mxu0 0.0
        %533 = vmatprep.subr.mxu0 0.0
        %534 = vmatpush1.msra.mxu0 0.0
        %535 = vmatprep.subr.mxu0 0.0
        %536 = vmatpush1.msra.mxu0 0.0
        %537 = vmatprep.subr.mxu0 0.0
        %538 = vmatpush1.msra.mxu0 0.0
        %539 = vmatprep.subr.mxu0 0.0
        %540 = vmatpush1.msra.mxu0 0.0
        %541 = vmatprep.subr.mxu0 0.0
        %542 = vmatpush1.msra.mxu0 0.0
        %543 = vmatprep.subr.mxu0 0.0
        %544 = vmatpush1.msra.mxu0 0.0
        %545 = vmatprep.subr.mxu0 0.0
        %546 = vmatpush1.msra.mxu0 0.0
        %547 = vmatprep.subr.mxu0 0.0
        %548 = vmatpush1.msra.mxu0 0.0
        %549 = vmatprep.subr.mxu0 0.0
        %550 = vmatpush1.msra.mxu0 0.0
        %551 = vmatprep.subr.mxu0 0.0
        %552 = vmatpush1.msra.mxu0 0.0
        %553 = vmatprep.subr.mxu0 0.0
        %554 = vmatpush1.msra.mxu0 0.0
        %555 = vmatprep.subr.mxu0 0.0
        %556 = vmatpush1.msra.mxu0 0.0
        %557 = vmatprep.subr.mxu0 0.0
        %558 = vmatpush1.msra.mxu0 0.0
        %559 = vmatprep.subr.mxu0 0.0
        %560 = vmatpush1.msra.mxu0 0.0
        %561 = vmatprep.subr.mxu0 0.0
        %562 = vmatpush1.msra.mxu0 0.0
        %563 = vmatprep.subr.mxu0 0.0
        %564 = vmatpush1.msra.mxu0 0.0
        %565 = vmatprep.subr.mxu0 0.0
        %566 = vmatpush1.msra.mxu0 0.0
        %567 = vmatprep.mubr.f32.mxu0 0.0
        %v568 = vand.u32 %v187, 4294901760
        %v569 = vsub.f32 %v187, %v568
        %v570 = vand.u32 %v569, 4294901760
        %571 = vmatmul.mubr.f32.gmra.mrb[0].mxu0 %v570
        %v572 = vpop.f32.mrb[0].mxu0
        %v573 = vadd.f32 %v477, %v572
        %v574 = vpop.f32.mrb[0].mxu0
        %575 = vmatprep.mubr.f32.mxu0 0.0
        %v576 = vand.u32 %v190, 4294901760
        %v577 = vsub.f32 %v190, %v576
        %v578 = vand.u32 %v577, 4294901760
        %579 = vmatmul.mubr.f32.gmra.mrb[0].mxu0 %v578
        %v580 = vpop.f32.mrb[0].mxu0
        %v581 = vadd.f32 %v484, %v580
        %v582 = vpop.f32.mrb[0].mxu0
        %583 = vmatprep.mubr.f32.mxu0 0.0
        %v584 = vand.u32 %v193, 4294901760
        %v585 = vsub.f32 %v193, %v584
        %v586 = vand.u32 %v585, 4294901760
        %587 = vmatmul.mubr.f32.gmra.mrb[0].mxu0 %v586
        %v588 = vpop.f32.mrb[0].mxu0
        %v589 = vadd.f32 %v491, %v588
        %v590 = vpop.f32.mrb[0].mxu0
        %591 = vmatprep.mubr.f32.mxu0 0.0
        %v592 = vand.u32 %v196, 4294901760
        %v593 = vsub.f32 %v196, %v592
        %v594 = vand.u32 %v593, 4294901760
        %595 = vmatmul.mubr.f32.gmra.mrb[0].mxu0 %v594
        %v596 = vpop.f32.mrb[0].mxu0
        %v597 = vadd.f32 %v498, %v596
        %v598 = vpop.f32.mrb[0].mxu0
        %599 = vdwg.mxu0
        %600 = vmatprep.subr.mxu0 0.0
        %v601 = vand.u32 %v183, 4294901760
        %v602 = vsub.f32 %v183, %v601
        %v603 = vand.u32 %v602, 4294901760
        %604 = vmatpush1.msra.mxu0 %v603
        %605 = vmatprep.subr.mxu0 0.0
        %v606 = vand.u32 %v184, 4294901760
        %v607 = vsub.f32 %v184, %v606
        %v608 = vand.u32 %v607, 4294901760
        %609 = vmatpush1.msra.mxu0 %v608
        %610 = vmatprep.subr.mxu0 0.0
        %611 = vmatpush1.msra.mxu0 0.0
        %612 = vmatprep.subr.mxu0 0.0
        %613 = vmatpush1.msra.mxu0 0.0
        %614 = vmatprep.subr.mxu0 0.0
        %615 = vmatpush1.msra.mxu0 0.0
        %616 = vmatprep.subr.mxu0 0.0
        %617 = vmatpush1.msra.mxu0 0.0
        %618 = vmatprep.subr.mxu0 0.0
        %619 = vmatpush1.msra.mxu0 0.0
        %620 = vmatprep.subr.mxu0 0.0
        %621 = vmatpush1.msra.mxu0 0.0
        %622 = vmatprep.subr.mxu0 0.0
        %623 = vmatpush1.msra.mxu0 0.0
        %624 = vmatprep.subr.mxu0 0.0
        %625 = vmatpush1.msra.mxu0 0.0
        %626 = vmatprep.subr.mxu0 0.0
        %627 = vmatpush1.msra.mxu0 0.0
        %628 = vmatprep.subr.mxu0 0.0
        %629 = vmatpush1.msra.mxu0 0.0
        %630 = vmatprep.subr.mxu0 0.0
        %631 = vmatpush1.msra.mxu0 0.0
        %632 = vmatprep.subr.mxu0 0.0
        %633 = vmatpush1.msra.mxu0 0.0
        %634 = vmatprep.subr.mxu0 0.0
        %635 = vmatpush1.msra.mxu0 0.0
        %636 = vmatprep.subr.mxu0 0.0
        %637 = vmatpush1.msra.mxu0 0.0
        %638 = vmatprep.subr.mxu0 0.0
        %639 = vmatpush1.msra.mxu0 0.0
        %640 = vmatprep.subr.mxu0 0.0
        %641 = vmatpush1.msra.mxu0 0.0
        %642 = vmatprep.subr.mxu0 0.0
        %643 = vmatpush1.msra.mxu0 0.0
        %644 = vmatprep.subr.mxu0 0.0
        %645 = vmatpush1.msra.mxu0 0.0
        %646 = vmatprep.subr.mxu0 0.0
        %647 = vmatpush1.msra.mxu0 0.0
        %648 = vmatprep.subr.mxu0 0.0
        %649 = vmatpush1.msra.mxu0 0.0
        %650 = vmatprep.subr.mxu0 0.0
        %651 = vmatpush1.msra.mxu0 0.0
        %652 = vmatprep.subr.mxu0 0.0
        %653 = vmatpush1.msra.mxu0 0.0
        %654 = vmatprep.subr.mxu0 0.0
        %655 = vmatpush1.msra.mxu0 0.0
        %656 = vmatprep.subr.mxu0 0.0
        %657 = vmatpush1.msra.mxu0 0.0
        %658 = vmatprep.subr.mxu0 0.0
        %659 = vmatpush1.msra.mxu0 0.0
        %660 = vmatprep.subr.mxu0 0.0
        %661 = vmatpush1.msra.mxu0 0.0
        %662 = vmatprep.subr.mxu0 0.0
        %663 = vmatpush1.msra.mxu0 0.0
        %664 = vmatprep.subr.mxu0 0.0
        %665 = vmatpush1.msra.mxu0 0.0
        %666 = vmatprep.subr.mxu0 0.0
        %667 = vmatpush1.msra.mxu0 0.0
        %668 = vmatprep.subr.mxu0 0.0
        %669 = vmatpush1.msra.mxu0 0.0
        %670 = vmatprep.mubr.f32.mxu0 0.0
        %v671 = vand.u32 %v187, 4294901760
        %672 = vmatmul.mubr.f32.gmra.mrb[0].mxu0 %v671
        %v673 = vpop.f32.mrb[0].mxu0
        %v674 = vadd.f32 %v573, %v673
        %v675 = vpop.f32.mrb[0].mxu0
        %676 = vmatprep.mubr.f32.mxu0 0.0
        %v677 = vand.u32 %v190, 4294901760
        %678 = vmatmul.mubr.f32.gmra.mrb[0].mxu0 %v677
        %v679 = vpop.f32.mrb[0].mxu0
        %v680 = vadd.f32 %v581, %v679
        %v681 = vpop.f32.mrb[0].mxu0
        %682 = vmatprep.mubr.f32.mxu0 0.0
        %v683 = vand.u32 %v193, 4294901760
        %684 = vmatmul.mubr.f32.gmra.mrb[0].mxu0 %v683
        %v685 = vpop.f32.mrb[0].mxu0
        %v686 = vadd.f32 %v589, %v685
        %v687 = vpop.f32.mrb[0].mxu0
        %688 = vmatprep.mubr.f32.mxu0 0.0
        %v689 = vand.u32 %v196, 4294901760
        %690 = vmatmul.mubr.f32.gmra.mrb[0].mxu0 %v689
        %v691 = vpop.f32.mrb[0].mxu0
        %v692 = vadd.f32 %v597, %v691
        %v693 = vpop.f32.mrb[0].mxu0
        %694 = vdwg.mxu0
        %695 = vmatprep.subr.mxu0 0.0
        %v696 = vand.u32 %v183, 4294901760
        %697 = vmatpush1.msra.mxu0 %v696
        %698 = vmatprep.subr.mxu0 0.0
        %v699 = vand.u32 %v184, 4294901760
        %700 = vmatpush1.msra.mxu0 %v699
        %701 = vmatprep.subr.mxu0 0.0
        %702 = vmatpush1.msra.mxu0 0.0
        %703 = vmatprep.subr.mxu0 0.0
        %704 = vmatpush1.msra.mxu0 0.0
        %705 = vmatprep.subr.mxu0 0.0
        %706 = vmatpush1.msra.mxu0 0.0
        %707 = vmatprep.subr.mxu0 0.0
        %708 = vmatpush1.msra.mxu0 0.0
        %709 = vmatprep.subr.mxu0 0.0
        %710 = vmatpush1.msra.mxu0 0.0
        %711 = vmatprep.subr.mxu0 0.0
        %712 = vmatpush1.msra.mxu0 0.0
        %713 = vmatprep.subr.mxu0 0.0
        %714 = vmatpush1.msra.mxu0 0.0
        %715 = vmatprep.subr.mxu0 0.0
        %716 = vmatpush1.msra.mxu0 0.0
        %717 = vmatprep.subr.mxu0 0.0
        %718 = vmatpush1.msra.mxu0 0.0
        %719 = vmatprep.subr.mxu0 0.0
        %720 = vmatpush1.msra.mxu0 0.0
        %721 = vmatprep.subr.mxu0 0.0
        %722 = vmatpush1.msra.mxu0 0.0
        %723 = vmatprep.subr.mxu0 0.0
        %724 = vmatpush1.msra.mxu0 0.0
        %725 = vmatprep.subr.mxu0 0.0
        %726 = vmatpush1.msra.mxu0 0.0
        %727 = vmatprep.subr.mxu0 0.0
        %728 = vmatpush1.msra.mxu0 0.0
        %729 = vmatprep.subr.mxu0 0.0
        %730 = vmatpush1.msra.mxu0 0.0
        %731 = vmatprep.subr.mxu0 0.0
        %732 = vmatpush1.msra.mxu0 0.0
        %733 = vmatprep.subr.mxu0 0.0
        %734 = vmatpush1.msra.mxu0 0.0
        %735 = vmatprep.subr.mxu0 0.0
        %736 = vmatpush1.msra.mxu0 0.0
        %737 = vmatprep.subr.mxu0 0.0
        %738 = vmatpush1.msra.mxu0 0.0
        %739 = vmatprep.subr.mxu0 0.0
        %740 = vmatpush1.msra.mxu0 0.0
        %741 = vmatprep.subr.mxu0 0.0
        %742 = vmatpush1.msra.mxu0 0.0
        %743 = vmatprep.subr.mxu0 0.0
        %744 = vmatpush1.msra.mxu0 0.0
        %745 = vmatprep.subr.mxu0 0.0
        %746 = vmatpush1.msra.mxu0 0.0
        %747 = vmatprep.subr.mxu0 0.0
        %748 = vmatpush1.msra.mxu0 0.0
        %749 = vmatprep.subr.mxu0 0.0
        %750 = vmatpush1.msra.mxu0 0.0
        %751 = vmatprep.subr.mxu0 0.0
        %752 = vmatpush1.msra.mxu0 0.0
        %753 = vmatprep.subr.mxu0 0.0
        %754 = vmatpush1.msra.mxu0 0.0
        %755 = vmatprep.subr.mxu0 0.0
        %756 = vmatpush1.msra.mxu0 0.0
        %757 = vmatprep.subr.mxu0 0.0
        %758 = vmatpush1.msra.mxu0 0.0
        %759 = vmatprep.subr.mxu0 0.0
        %760 = vmatpush1.msra.mxu0 0.0
        %761 = vmatprep.mubr.f32.mxu0 0.0
        %v762 = vand.u32 %v187, 4294901760
        %763 = vmatmul.mubr.f32.gmra.mrb[0].mxu0 %v762
        %v764 = vpop.f32.mrb[0].mxu0
        %v765 = vadd.f32 %v674, %v764
        %v766 = vpop.f32.mrb[0].mxu0
        %767 = vmatprep.mubr.f32.mxu0 0.0
        %v768 = vand.u32 %v190, 4294901760
        %769 = vmatmul.mubr.f32.gmra.mrb[0].mxu0 %v768
        %v770 = vpop.f32.mrb[0].mxu0
        %v771 = vadd.f32 %v680, %v770
        %v772 = vpop.f32.mrb[0].mxu0
        %773 = vmatprep.mubr.f32.mxu0 0.0
        %v774 = vand.u32 %v193, 4294901760
        %775 = vmatmul.mubr.f32.gmra.mrb[0].mxu0 %v774
        %v776 = vpop.f32.mrb[0].mxu0
        %v777 = vadd.f32 %v686, %v776
        %v778 = vpop.f32.mrb[0].mxu0
        %779 = vmatprep.mubr.f32.mxu0 0.0
        %v780 = vand.u32 %v196, 4294901760
        %781 = vmatmul.mubr.f32.gmra.mrb[0].mxu0 %v780
        %v782 = vpop.f32.mrb[0].mxu0
        %v783 = vadd.f32 %v692, %v782
        %v784 = vpop.f32.mrb[0].mxu0
        %785 = vdwg.mxu0
        %786 = vst [vmem:[%s178] sm:$0xff] %v765
        %787 = vst [vmem:[%s178 + $0x8] sm:$0xff] %v771
        %788 = vst [vmem:[%s178 + $0x10] sm:$0xff] %v777
        %789 = vst [vmem:[%s178 + $0x18] sm:$0xff] %v783
        %s790 = sand.u32 %s90, 1
        %s791 = scalar_lea.sflag [#allocation4], %s790
        %s792 = sand.u32 %s90, 1
        %s793 = smul.addr %s792, 32
        %s794 = scalar_lea.vmem [#allocation5], %s793
        // Predicated region
        $region33: #{tpu_custom_call.1} parent=27 // pred_check
          %p795 = pneg %p100
        $region34: #{tpu_custom_call.1} parent=27 // pred_check_branch
          %797 = sbr.rel (%p795) target = $region36
        $region35: #{tpu_custom_call.1} parent=27 // pred_region
          %s799 = ssub.s32 512, 512
          %800 = vsyncadd %s791, %s799
          %s801 = smul.addr %s23, 8
          %s802 = sadd.s32 %s24, %s801
          %s803 = smul.addr %s802, 128
          %s804 = scalar_lea.hbm %s2, %s803
          %s805 = sshll.u32 %s794, 4
          %s806 = int_to_ptr.vmem [resolvable:$true] %s805
          %811 = dma.vmem_to_hbm [thread:$0]  %s806, 512, %s804, %s791, 128, 256, 8
        $region36: #{tpu_custom_call.1} parent=27 // pred_fallthru
          _
      $region28: #{tpu_custom_call.1} parent=5 // pred_fallthru
        _
      %p812 = scmp.le.s32.totalorder 2, %s14
      // Predicated region
      $region37: #{tpu_custom_call.1} parent=5 // pred_check
        %p813 = pneg %p812
      $region38: #{tpu_custom_call.1} parent=5 // pred_check_branch
        %815 = sbr.rel (%p813) target = $region40
      $region39: #{tpu_custom_call.1} parent=5 // pred_region
        %s816 = ssub.s32 %s14, 2
        // Predicated region
        $region41: #{tpu_custom_call.1} parent=39 // pred_check
          %p817 = pneg %p106
        $region42: #{tpu_custom_call.1} parent=39 // pred_check_branch
          %819 = sbr.rel (%p817) target = $region44
        $region43: #{tpu_custom_call.1} parent=39 // pred_region
          %s820 = sand.u32 %s91, 1
          %s821 = scalar_lea.sflag [#allocation4], %s820
          %s822 = sand.u32 %s91, 1
          %s823 = smul.addr %s822, 32
          %s824 = scalar_lea.vmem [#allocation5], %s823
          %825 = dma.done %s821, 512
        $region44: #{tpu_custom_call.1} parent=39 // pred_fallthru
          _
      $region40: #{tpu_custom_call.1} parent=5 // pred_fallthru
        _
    $region6: #{tpu_custom_call.1} parent=1 // loop_footer
      %s18 = sadd.s32 1, %s14
    $region7: #{tpu_custom_call.1} parent=1 // loop_footer_branch
      %13 = sbr.rel target = $region3
    $region8: #{tpu_custom_call.1} parent=1 // loop_exit
      _
    %826 = vsyncpa [#allocation3], 1
    %s827 = scalar_lea.sflag [#allocation3], 1
    %828 = vsyncpa %s827, 1
    %829 = vsyncpa [#allocation4], 1
    %s830 = scalar_lea.sflag [#allocation4], 1
    %831 = vsyncpa %s830, 1

</llo_original>
